<compile_context>
chip_gen: v6e
topology: v6e:2x2x1
jax: 0.10.0
libtpu: 0.0.40
codegen_flags: <defaults>
</compile_context>

<pallas_src>
import jax
import jax.numpy as jnp
import numpy as np
from jax.experimental import pallas as pl
from jax.experimental.pallas import tpu as pltpu

BOOST_ACCEL = 0.18
DRAG_COEFF = 0.25
FPA_GAIN = 0.25
FRAME_TIME = 0.1
GRAVITY_ACCEL = 0.12
RHO = 0.1225
S = 0.1

# Compile-time folded constants.
_DRAG_K = 0.5 * RHO * S * DRAG_COEFF * FRAME_TIME      # 0.5*rho*S*Cd*dt
_BOOST_K = 2.0 * BOOST_ACCEL * FRAME_TIME               # the boost term appears twice in the reference
_G_DT = GRAVITY_ACCEL * FRAME_TIME
_FPA_K = FPA_GAIN * FRAME_TIME

LANE_TILE = 128  # lane-dense tile on the batch axis


def dynamics_kernel(state_ref, action_ref, out_ref):
    # state_ref : (4, LANE_TILE) f32  rows = [x, x_dot, fpa, fpa_dot], lanes = batch
    # action_ref: (2, LANE_TILE) f32  rows = [thrust, fpa_ctrl]
    x = state_ref[0:1, :]
    x_dot = state_ref[1:2, :]
    fpa = state_ref[2:3, :]
    fpa_dot = state_ref[3:4, :]
    a0 = action_ref[0:1, :]
    a1 = action_ref[1:2, :]

    # Linear kinematics (the former step_mat matmul), now two fused VPU adds.
    out_ref[0:1, :] = x + FRAME_TIME * x_dot
    out_ref[2:3, :] = fpa + FRAME_TIME * fpa_dot

    # x_dot update: gravity projection, quadratic drag, boost (counted twice,
    # exactly as in the PyTorch reference; folded into one term here).
    out_ref[1:2, :] = (x_dot
                       + _G_DT * jnp.cos(fpa)
                       - _DRAG_K * x_dot * x_dot
                       - _BOOST_K * a0)

    # fpa_dot update: gravity turn + fpa control.
    out_ref[3:4, :] = fpa_dot + _G_DT * jnp.sin(fpa) - _FPA_K * a1


def dynamics_forward(state, action):
    """state: (4,) or (4, B) f32; action: (2,) or (2, B) f32 -> same leading shape."""
    state = jnp.asarray(state, jnp.float32)
    action = jnp.asarray(action, jnp.float32)

    single = state.ndim == 1
    if single:
        state = state[:, None]
        action = action[:, None]

    B = state.shape[1]
    n_tiles = max(1, pl.cdiv(B, LANE_TILE))
    B_pad = n_tiles * LANE_TILE
    if B_pad != B:
        state = jnp.pad(state, ((0, 0), (0, B_pad - B)))
        action = jnp.pad(action, ((0, 0), (0, B_pad - B)))

    out = pl.pallas_call(
        dynamics_kernel,
        out_shape=jax.ShapeDtypeStruct((4, B_pad), jnp.float32),
        grid_spec=pltpu.PrefetchScalarGridSpec(
            num_scalar_prefetch=0,
            grid=(n_tiles,),
            in_specs=[
                pl.BlockSpec((4, LANE_TILE), lambda i: (0, i)),
                pl.BlockSpec((2, LANE_TILE), lambda i: (0, i)),
            ],
            out_specs=pl.BlockSpec((4, LANE_TILE), lambda i: (0, i)),
        ),
        compiler_params=pltpu.CompilerParams(
            dimension_semantics=("parallel",)),
    )(state, action)

    out = out[:, :B]
    if single:
        out = out[:, 0]
    return out


def dynamics_reference(state, action):
    """Pure-numpy reference mirroring the PyTorch forward. Supports (4,[B]) / (2,[B])."""
    state = np.asarray(state, dtype=np.float32)
    action = np.asarray(action, dtype=np.float32)
    x, x_dot, fpa, fpa_dot = state[0], state[1], state[2], state[3]
    a0, a1 = action[0], action[1]
    new = np.empty_like(state)
    new[0] = x + FRAME_TIME * x_dot
    new[1] = (x_dot
              + (GRAVITY_ACCEL * np.cos(fpa)
                 - 0.5 * RHO * x_dot ** 2 * S * DRAG_COEFF
                 - BOOST_ACCEL * a0) * FRAME_TIME
              - BOOST_ACCEL * a0 * FRAME_TIME)
    new[2] = fpa + FRAME_TIME * fpa_dot
    new[3] = fpa_dot + GRAVITY_ACCEL * np.sin(fpa) * FRAME_TIME - FPA_GAIN * a1 * FRAME_TIME
    return new


if __name__ == "__main__":
    key = jax.random.PRNGKey(0)
    k_state, k_action, k_state_b, k_action_b = jax.random.split(key, 4)

    # Single-state call (original module signature).
    state = jax.random.normal(k_state, (4,), dtype=jnp.float32)
    action = jax.random.normal(k_action, (2,), dtype=jnp.float32)
    out = dynamics_forward(state, action)
    jax.block_until_ready(out)
    ref = dynamics_reference(np.asarray(state), np.asarray(action))
    np.testing.assert_allclose(np.asarray(out), ref, rtol=1e-5, atol=1e-6)

    # Batched call (lane-dense path, exercises the grid).
    Bb = 256
    state_b = jax.random.normal(k_state_b, (4, Bb), dtype=jnp.float32)
    action_b = jax.random.normal(k_action_b, (2, Bb), dtype=jnp.float32)
    out_b = dynamics_forward(state_b, action_b)
    jax.block_until_ready(out_b)
    ref_b = dynamics_reference(np.asarray(state_b), np.asarray(action_b))
    np.testing.assert_allclose(np.asarray(out_b), ref_b, rtol=1e-5, atol=1e-6)

    print("KERNEL_OK")
</pallas_src>

<mosaic_0001>
module attributes {stable_mosaic.version = 11 : i64} {
  func.func @dynamics_kernel(%arg0: i32, %arg1: memref<4x128xf32, #tpu.memory_space<vmem>>, %arg2: memref<2x128xf32, #tpu.memory_space<vmem>>, %arg3: memref<4x128xf32, #tpu.memory_space<vmem>>) attributes {dimension_semantics = [#tpu.dimension_semantics<parallel>], iteration_bounds = array<i64: 1>, scalar_prefetch = 0 : i64, scratch_operands = 0 : i64, tpu.core_type = #tpu.core_type<tc>, window_params = [{transform_indices = @transform_0, window_bounds = array<i64: 4, 128>}, {transform_indices = @transform_1, window_bounds = array<i64: 2, 128>}, {transform_indices = @transform_2, window_bounds = array<i64: 4, 128>}]} {
    %c0 = arith.constant 0 : index
    %c0_0 = arith.constant 0 : index
    %0 = vector.load %arg1[%c0, %c0_0] : memref<4x128xf32, #tpu.memory_space<vmem>>, vector<1x128xf32>
    %c1 = arith.constant 1 : index
    %c0_1 = arith.constant 0 : index
    %1 = vector.load %arg1[%c1, %c0_1] : memref<4x128xf32, #tpu.memory_space<vmem>>, vector<1x128xf32>
    %c2 = arith.constant 2 : index
    %c0_2 = arith.constant 0 : index
    %2 = vector.load %arg1[%c2, %c0_2] : memref<4x128xf32, #tpu.memory_space<vmem>>, vector<1x128xf32>
    %c3 = arith.constant 3 : index
    %c0_3 = arith.constant 0 : index
    %3 = vector.load %arg1[%c3, %c0_3] : memref<4x128xf32, #tpu.memory_space<vmem>>, vector<1x128xf32>
    %c0_4 = arith.constant 0 : index
    %c0_5 = arith.constant 0 : index
    %4 = vector.load %arg2[%c0_4, %c0_5] : memref<2x128xf32, #tpu.memory_space<vmem>>, vector<1x128xf32>
    %c1_6 = arith.constant 1 : index
    %c0_7 = arith.constant 0 : index
    %5 = vector.load %arg2[%c1_6, %c0_7] : memref<2x128xf32, #tpu.memory_space<vmem>>, vector<1x128xf32>
    %cst = arith.constant 1.000000e-01 : f32
    %6 = vector.broadcast %cst : f32 to vector<1x128xf32>
    %7 = arith.mulf %6, %1 : vector<1x128xf32>
    %8 = arith.addf %0, %7 : vector<1x128xf32>
    %c0_8 = arith.constant 0 : index
    %c0_9 = arith.constant 0 : index
    %9 = vector.load %arg3[%c0_8, %c0_9] : memref<4x128xf32, #tpu.memory_space<vmem>>, vector<1x128xf32>
    tpu.vector_store %arg3[%c0_8, %c0_9], %8 {strides = array<i32>} : memref<4x128xf32, #tpu.memory_space<vmem>>, vector<1x128xf32>,
    %cst_10 = arith.constant 1.000000e-01 : f32
    %10 = vector.broadcast %cst_10 : f32 to vector<1x128xf32>
    %11 = arith.mulf %10, %3 : vector<1x128xf32>
    %12 = arith.addf %2, %11 : vector<1x128xf32>
    %c2_11 = arith.constant 2 : index
    %c0_12 = arith.constant 0 : index
    %13 = vector.load %arg3[%c2_11, %c0_12] : memref<4x128xf32, #tpu.memory_space<vmem>>, vector<1x128xf32>
    tpu.vector_store %arg3[%c2_11, %c0_12], %12 {strides = array<i32>} : memref<4x128xf32, #tpu.memory_space<vmem>>, vector<1x128xf32>,
    %14 = math.cos %2 : vector<1x128xf32>
    %cst_13 = arith.constant 1.200000e-02 : f32
    %15 = vector.broadcast %cst_13 : f32 to vector<1x128xf32>
    %16 = arith.mulf %15, %14 : vector<1x128xf32>
    %17 = arith.addf %1, %16 : vector<1x128xf32>
    %cst_14 = arith.constant 1.531250e-04 : f32
    %18 = vector.broadcast %cst_14 : f32 to vector<1x128xf32>
    %19 = arith.mulf %18, %1 : vector<1x128xf32>
    %20 = arith.mulf %19, %1 : vector<1x128xf32>
    %21 = arith.subf %17, %20 : vector<1x128xf32>
    %cst_15 = arith.constant 3.600000e-02 : f32
    %22 = vector.broadcast %cst_15 : f32 to vector<1x128xf32>
    %23 = arith.mulf %22, %4 : vector<1x128xf32>
    %24 = arith.subf %21, %23 : vector<1x128xf32>
    %c1_16 = arith.constant 1 : index
    %c0_17 = arith.constant 0 : index
    %25 = vector.load %arg3[%c1_16, %c0_17] : memref<4x128xf32, #tpu.memory_space<vmem>>, vector<1x128xf32>
    tpu.vector_store %arg3[%c1_16, %c0_17], %24 {strides = array<i32>} : memref<4x128xf32, #tpu.memory_space<vmem>>, vector<1x128xf32>,
    %26 = math.sin %2 : vector<1x128xf32>
    %cst_18 = arith.constant 1.200000e-02 : f32
    %27 = vector.broadcast %cst_18 : f32 to vector<1x128xf32>
    %28 = arith.mulf %27, %26 : vector<1x128xf32>
    %29 = arith.addf %3, %28 : vector<1x128xf32>
    %cst_19 = arith.constant 2.500000e-02 : f32
    %30 = vector.broadcast %cst_19 : f32 to vector<1x128xf32>
    %31 = arith.mulf %30, %5 : vector<1x128xf32>
    %32 = arith.subf %29, %31 : vector<1x128xf32>
    %c3_20 = arith.constant 3 : index
    %c0_21 = arith.constant 0 : index
    %33 = vector.load %arg3[%c3_20, %c0_21] : memref<4x128xf32, #tpu.memory_space<vmem>>, vector<1x128xf32>
    tpu.vector_store %arg3[%c3_20, %c0_21], %32 {strides = array<i32>} : memref<4x128xf32, #tpu.memory_space<vmem>>, vector<1x128xf32>,
    return
  }
  func.func @transform_0(%arg0: i32) -> (i32, i32) {
    %c0_i32 = arith.constant 0 : i32
    %c0_i32_0 = arith.constant 0 : i32
    return %c0_i32, %arg0 : i32, i32
  }
  func.func @transform_1(%arg0: i32) -> (i32, i32) {
    %c0_i32 = arith.constant 0 : i32
    %c0_i32_0 = arith.constant 0 : i32
    return %c0_i32, %arg0 : i32, i32
  }
  func.func @transform_2(%arg0: i32) -> (i32, i32) {
    %c0_i32 = arith.constant 0 : i32
    %c0_i32_0 = arith.constant 0 : i32
    return %c0_i32, %arg0 : i32, i32
  }
}

</mosaic_0001>

<llo_original>
// kernel: tpu_custom_call.1
$region0: #{tpu_custom_call.1}
  #allocation0 [shape = 'u32[]', space=smem, size = 0x4, offset = 0x4, fixed_abs, tag = 'smem constant byte address 0x4 - core index']
  #allocation1 [shape = 'u32[144,128]{1,0:T(1,128)}', space=vmem, size = 0x12000, scoped, tag = 'internal scratch']
  %s0 = inlined_call_operand.hbm [shape: f32[4,128], index: 0, kind: input, shape index: {}]
  %s1 = inlined_call_operand.hbm [shape: f32[2,128], index: 1, kind: input, shape index: {}]
  %s2 = inlined_call_operand.hbm [shape: f32[4,128], index: 2, kind: output, shape index: {}]
  %s3 = sld [smem:[#allocation0]]
  $region26: #{tpu_custom_call.1} parent=0
    _
  %s5 = ssub.s32 1, %s3
  %s6 = scalar_select 0, %s5, %s3
  $region1: #{tpu_custom_call.1} parent=0
    #allocation2 [shape = 'u8[2048]{0}', space=vmem, size = 0x800, scoped, tag = 'input window, operand 0, single buffered']
    #allocation3 [shape = 's32[1]{0}', space=sflag, size = 0x4, scoped, tag = 'scoped memory for tpu_custom_call.1']
    #allocation4 [shape = 's32[1]{0}', space=sflag, size = 0x4, scoped, tag = 'scoped memory for tpu_custom_call.1']
    #allocation5 [shape = 'u8[1024]{0}', space=vmem, size = 0x400, scoped, tag = 'input window, operand 1, single buffered']
    #allocation6 [shape = 's32[1]{0}', space=sflag, size = 0x4, scoped, tag = 'scoped memory for tpu_custom_call.1']
    #allocation7 [shape = 'u8[2048]{0}', space=vmem, size = 0x800, scoped, tag = 'output window, operand 0, single buffered']
    %7 = vsyncpa [#allocation3], 0
    %8 = vsyncpa [#allocation6], 0
    %9 = vsyncpa [#allocation4], 0
    // Predicated region
    $region2: #{tpu_custom_call.1} parent=1 // pred_check
      _
    $region3: #{tpu_custom_call.1} parent=1 // pred_check_branch
      %11 = sbr.rel (0) target = $region5
    $region4: #{tpu_custom_call.1} parent=1 // pred_region
      %s13 = ssub.s32 64, 64
      %14 = vsyncadd [#allocation3], %s13
      %s16 = sshll.u32 [#allocation2], 4
      %s17 = int_to_ptr.vmem [resolvable:$true] %s16
      %19 = dma.hbm_to_vmem [thread:$0]  %s0, 64, %s17, [#allocation3]
    $region5: #{tpu_custom_call.1} parent=1 // pred_fallthru
      _
    // Predicated region
    $region6: #{tpu_custom_call.1} parent=1 // pred_check
      _
    $region7: #{tpu_custom_call.1} parent=1 // pred_check_branch
      %21 = sbr.rel (0) target = $region9
    $region8: #{tpu_custom_call.1} parent=1 // pred_region
      %s23 = ssub.s32 32, 32
      %24 = vsyncadd [#allocation6], %s23
      %s26 = sshll.u32 [#allocation5], 4
      %s27 = int_to_ptr.vmem [resolvable:$true] %s26
      %29 = dma.hbm_to_vmem [thread:$0]  %s1, 32, %s27, [#allocation6]
    $region9: #{tpu_custom_call.1} parent=1 // pred_fallthru
      _
    // Predicated region
    $region10: #{tpu_custom_call.1} parent=1 // pred_check
      _
    $region11: #{tpu_custom_call.1} parent=1 // pred_check_branch
      %31 = sbr.rel (0) target = $region13
    $region12: #{tpu_custom_call.1} parent=1 // pred_region
      %32 = dma.done [#allocation3], 64
    $region13: #{tpu_custom_call.1} parent=1 // pred_fallthru
      _
    // Predicated region
    $region14: #{tpu_custom_call.1} parent=1 // pred_check
      _
    $region15: #{tpu_custom_call.1} parent=1 // pred_check_branch
      %34 = sbr.rel (0) target = $region17
    $region16: #{tpu_custom_call.1} parent=1 // pred_region
      %35 = dma.done [#allocation6], 32
    $region17: #{tpu_custom_call.1} parent=1 // pred_fallthru
      _
    %v36 = vld [vmem:[#allocation2] sm:$0x1]
    %v37 = vld [vmem:[#allocation2 + $0x1] sm:$0x1]
    %v38 = vld [vmem:[#allocation2 + $0x2] sm:$0x1]
    %v39 = vld [vmem:[#allocation2 + $0x3] sm:$0x1]
    %v40 = vld [vmem:[#allocation5] sm:$0x1]
    %v41 = vld [vmem:[#allocation5 + $0x1] sm:$0x1]
    %v42 = vmul.f32 %v37, 0.1
    %v43 = vadd.f32 %v36, %v42
    %44 = vst [vmem:[#allocation7] sm:$0x1] %v43
    %v45 = vmul.f32 %v39, 0.1
    %v46 = vadd.f32 %v38, %v45
    %47 = vst [vmem:[#allocation7 + $0x2] sm:$0x1] %v46
    %v48 = vand.u32 2147483647, %v38
    %vm49 = vcmp.le.f32.partialorder %v48, 0.7853982
    %vm50 = vcmp.lt.s32.totalorder %v38, 0
    %v51 = vand.u32 %v38, 2139095040
    %v52 = vshrl.u32 %v51, 23
    %v53 = vsub.s32 %v52, 127
    %v54 = vand.u32 2147483647, %v38
    %v55 = vand.u32 %v54, 8388607
    %v56 = vor.u32 %v55, 8388608
    %v57 = vsub.s32 0, %v56
    %v58 = vadd.s32 %v53, 1
    %vm59 = vcmp.gt.s32.totalorder %v58, 0
    %v60 = vsel %vm59, %v58, 0
    %v61 = vshrl.u32 %v60, 5
    %v62 = vand.u32 %v60, 31
    %v63 = vsub.s32 32, %v62
    %v64 = vshrl.u32 683565275, %v63
    %v65 = vshll.u32 683565275, %v62
    %v66 = vshrl.u32 2475754826, %v63
    %v67 = vor.u32 %v65, %v66
    %v68 = vshll.u32 2475754826, %v62
    %v69 = vshrl.u32 2131351028, %v63
    %v70 = vor.u32 %v68, %v69
    %v71 = vshll.u32 2131351028, %v62
    %v72 = vshrl.u32 2102212464, %v63
    %v73 = vor.u32 %v71, %v72
    %v74 = vshll.u32 2102212464, %v62
    %v75 = vshrl.u32 920167782, %v63
    %v76 = vor.u32 %v74, %v75
    %v77 = vshll.u32 920167782, %v62
    %v78 = vshrl.u32 1326507024, %v63
    %v79 = vor.u32 %v77, %v78
    %vm80 = vcmp.lt.s32.totalorder %v61, 1
    %vm81 = vcmp.lt.s32.totalorder %v61, 2
    %vm82 = vcmp.lt.s32.totalorder %v61, 3
    %vm83 = vcmp.lt.s32.totalorder %v61, 4
    %v84 = vsel %vm80, %v64, %v67
    %v85 = vsel %vm83, %v73, 2102212464
    %v86 = vsel %vm82, %v70, %v85
    %v87 = vsel %vm81, %v84, %v86
    %v88 = vsel %vm80, %v67, %v70
    %v89 = vsel %vm83, %v76, 920167782
    %v90 = vsel %vm82, %v73, %v89
    %v91 = vsel %vm81, %v88, %v90
    %v92 = vsel %vm80, %v70, %v73
    %v93 = vsel %vm83, %v79, 1326507024
    %v94 = vsel %vm82, %v76, %v93
    %v95 = vsel %vm81, %v92, %v94
    %v96 = vshll.u32 %v56, 8
    %v97 = vmul.u32.u64.compose %v96, %v95
    %v98 = vextract.low.u32 %v97
    %v99 = vextract.high.u32 %v97
    %v100 = vmul.u32.u64.compose %v96, %v91
    %v101 = vextract.low.u32 %v100
    %v102 = vextract.high.u32 %v100
    %v103 = vmul.u32 %v96, %v87
    %v104 = vadd.s32 %v99, %v101
    %vm105 = vc.u32 %v99, %v101
    %v106 = vadd.s32 %v102, 1
    %v107 = vsel %vm105, %v106, %v102
    %v108 = vadd.s32 %v103, %v107
    %v109 = vadd.s32 %v108, 536870912
    %v110 = vshrl.u32 %v109, 30
    %v111 = vshll.u32 %v110, 30
    %v112 = vsub.s32 %v108, %v111
    %vm113 = vcmp.lt.s32.totalorder %v112, 0
    %v114 = vsub.s32 0, %v112
    %v115 = vsel %vm113, %v114, %v112
    %v116 = vclz %v115
    %v117 = vsub.s32 %v116, 2
    %vm118 = vcmp.gt.s32.totalorder 0, %v117
    %v119 = vsel %vm118, 0, %v117
    %v120 = vsub.s32 32, %v119
    %v121 = vshll.u32 %v112, %v119
    %v122 = vshrl.u32 %v104, %v120
    %v123 = vor.u32 %v121, %v122
    %v124 = vsub.s32 4294967266, %v119
    %v125 = vadd.s32 %v124, 127
    %v126 = vshll.u32 %v125, 23
    %v127 = vor.u32 4788187, %v126
    %v128 = vand.u32 2147483647, %v127
    %v130 = vcvt.s32.f32 %v123
    %v131 = vmul.f32 %v130, %v128
    %v132 = vxor.u32 %v131, 2147483648
    %v133 = vsel %vm50, %v132, %v131
    %v134 = vsub.s32 4, %v110
    %v135 = vsel %vm50, %v134, %v110
    %v136 = vsel %vm49, %v38, %v133
    %v137 = vsel %vm49, 0, %v135
    %v138 = vcosq.f32.pop %v136
    %v139 = vsinq.f32.pop %v136
    %vm140 = vweird.f32 %v38
    %v141 = vand.u32 %v137, 3
    %vm142 = vcmp.lt.s32.totalorder %v141, 2
    %vm143 = vcmp.eq.s32.totalorder %v141, 0
    %v144 = vxor.u32 %v139, 2147483648
    %v145 = vsel %vm143, %v138, %v144
    %vm146 = vcmp.eq.s32.totalorder %v141, 2
    %v147 = vxor.u32 %v138, 2147483648
    %v148 = vsel %vm146, %v147, %v139
    %v149 = vsel %vm142, %v145, %v148
    %v150 = vsel %vm140, nan, %v149
    %v151 = vmul.f32 %v150, 0.012
    %v152 = vadd.f32 %v37, %v151
    %v153 = vmul.f32 %v37, 0.000153125
    %v154 = vmul.f32 %v153, %v37
    %v155 = vsub.f32 %v152, %v154
    %v156 = vmul.f32 %v40, 0.036
    %v157 = vsub.f32 %v155, %v156
    %158 = vst [vmem:[#allocation7 + $0x1] sm:$0x1] %v157
    %v159 = vand.u32 2147483647, %v38
    %vm160 = vcmp.le.f32.partialorder %v159, 0.7853982
    %vm161 = vcmp.lt.s32.totalorder %v38, 0
    %v162 = vand.u32 %v38, 2139095040
    %v163 = vshrl.u32 %v162, 23
    %v164 = vsub.s32 %v163, 127
    %v165 = vand.u32 2147483647, %v38
    %v166 = vand.u32 %v165, 8388607
    %v167 = vor.u32 %v166, 8388608
    %v168 = vsub.s32 0, %v167
    %v169 = vadd.s32 %v164, 1
    %vm170 = vcmp.gt.s32.totalorder %v169, 0
    %v171 = vsel %vm170, %v169, 0
    %v172 = vshrl.u32 %v171, 5
    %v173 = vand.u32 %v171, 31
    %v174 = vsub.s32 32, %v173
    %v175 = vshrl.u32 683565275, %v174
    %v176 = vshll.u32 683565275, %v173
    %v177 = vshrl.u32 2475754826, %v174
    %v178 = vor.u32 %v176, %v177
    %v179 = vshll.u32 2475754826, %v173
    %v180 = vshrl.u32 2131351028, %v174
    %v181 = vor.u32 %v179, %v180
    %v182 = vshll.u32 2131351028, %v173
    %v183 = vshrl.u32 2102212464, %v174
    %v184 = vor.u32 %v182, %v183
    %v185 = vshll.u32 2102212464, %v173
    %v186 = vshrl.u32 920167782, %v174
    %v187 = vor.u32 %v185, %v186
    %v188 = vshll.u32 920167782, %v173
    %v189 = vshrl.u32 1326507024, %v174
    %v190 = vor.u32 %v188, %v189
    %vm191 = vcmp.lt.s32.totalorder %v172, 1
    %vm192 = vcmp.lt.s32.totalorder %v172, 2
    %vm193 = vcmp.lt.s32.totalorder %v172, 3
    %vm194 = vcmp.lt.s32.totalorder %v172, 4
    %v195 = vsel %vm191, %v175, %v178
    %v196 = vsel %vm194, %v184, 2102212464
    %v197 = vsel %vm193, %v181, %v196
    %v198 = vsel %vm192, %v195, %v197
    %v199 = vsel %vm191, %v178, %v181
    %v200 = vsel %vm194, %v187, 920167782
    %v201 = vsel %vm193, %v184, %v200
    %v202 = vsel %vm192, %v199, %v201
    %v203 = vsel %vm191, %v181, %v184
    %v204 = vsel %vm194, %v190, 1326507024
    %v205 = vsel %vm193, %v187, %v204
    %v206 = vsel %vm192, %v203, %v205
    %v207 = vshll.u32 %v167, 8
    %v208 = vmul.u32.u64.compose %v207, %v206
    %v209 = vextract.low.u32 %v208
    %v210 = vextract.high.u32 %v208
    %v211 = vmul.u32.u64.compose %v207, %v202
    %v212 = vextract.low.u32 %v211
    %v213 = vextract.high.u32 %v211
    %v214 = vmul.u32 %v207, %v198
    %v215 = vadd.s32 %v210, %v212
    %vm216 = vc.u32 %v210, %v212
    %v217 = vadd.s32 %v213, 1
    %v218 = vsel %vm216, %v217, %v213
    %v219 = vadd.s32 %v214, %v218
    %v220 = vadd.s32 %v219, 536870912
    %v221 = vshrl.u32 %v220, 30
    %v222 = vshll.u32 %v221, 30
    %v223 = vsub.s32 %v219, %v222
    %vm224 = vcmp.lt.s32.totalorder %v223, 0
    %v225 = vsub.s32 0, %v223
    %v226 = vsel %vm224, %v225, %v223
    %v227 = vclz %v226
    %v228 = vsub.s32 %v227, 2
    %vm229 = vcmp.gt.s32.totalorder 0, %v228
    %v230 = vsel %vm229, 0, %v228
    %v231 = vsub.s32 32, %v230
    %v232 = vshll.u32 %v223, %v230
    %v233 = vshrl.u32 %v215, %v231
    %v234 = vor.u32 %v232, %v233
    %v235 = vsub.s32 4294967266, %v230
    %v236 = vadd.s32 %v235, 127
    %v237 = vshll.u32 %v236, 23
    %v238 = vor.u32 4788187, %v237
    %v239 = vand.u32 2147483647, %v238
    %v241 = vcvt.s32.f32 %v234
    %v242 = vmul.f32 %v241, %v239
    %v243 = vxor.u32 %v242, 2147483648
    %v244 = vsel %vm161, %v243, %v242
    %v245 = vsub.s32 4, %v221
    %v246 = vsel %vm161, %v245, %v221
    %v247 = vsel %vm160, %v38, %v244
    %v248 = vsel %vm160, 0, %v246
    %v249 = vcosq.f32.pop %v247
    %v250 = vsinq.f32.pop %v247
    %vm251 = vweird.f32 %v38
    %v252 = vadd.s32 %v248, 3
    %v253 = vand.u32 %v252, 3
    %vm254 = vcmp.lt.s32.totalorder %v253, 2
    %vm255 = vcmp.eq.s32.totalorder %v253, 0
    %v256 = vxor.u32 %v250, 2147483648
    %v257 = vsel %vm255, %v249, %v256
    %vm258 = vcmp.eq.s32.totalorder %v253, 2
    %v259 = vxor.u32 %v249, 2147483648
    %v260 = vsel %vm258, %v259, %v250
    %v261 = vsel %vm254, %v257, %v260
    %v262 = vsel %vm251, nan, %v261
    %v263 = vmul.f32 %v262, 0.012
    %v264 = vadd.f32 %v39, %v263
    %v265 = vmul.f32 %v41, 0.025
    %v266 = vsub.f32 %v264, %v265
    %267 = vst [vmem:[#allocation7 + $0x3] sm:$0x1] %v266
    // Predicated region
    $region18: #{tpu_custom_call.1} parent=1 // pred_check
      _
    $region19: #{tpu_custom_call.1} parent=1 // pred_check_branch
      %269 = sbr.rel (0) target = $region21
    $region20: #{tpu_custom_call.1} parent=1 // pred_region
      %s271 = ssub.s32 64, 64
      %272 = vsyncadd [#allocation4], %s271
      %s274 = sshll.u32 [#allocation7], 4
      %s275 = int_to_ptr.vmem [resolvable:$true] %s274
      %277 = dma.vmem_to_hbm [thread:$0]  %s275, 64, %s2, [#allocation4]
    $region21: #{tpu_custom_call.1} parent=1 // pred_fallthru
      _
    // Predicated region
    $region22: #{tpu_custom_call.1} parent=1 // pred_check
      _
    $region23: #{tpu_custom_call.1} parent=1 // pred_check_branch
      %279 = sbr.rel (0) target = $region25
    $region24: #{tpu_custom_call.1} parent=1 // pred_region
      %280 = dma.done [#allocation4], 64
    $region25: #{tpu_custom_call.1} parent=1 // pred_fallthru
      _
    %281 = vsyncpa [#allocation3], 1
    %282 = vsyncpa [#allocation6], 1
    %283 = vsyncpa [#allocation4], 1

</llo_original>
